<compile_context>
chip_gen: v5e
topology: v5e:2x2
jax: 0.10.0
libtpu: 0.0.40
codegen_flags: <defaults>
</compile_context>

<pallas_src>
import numpy as np
import jax
import jax.numpy as jnp
from jax.experimental import pallas as pl
from jax.experimental.pallas import tpu as pltpu

_LANE = 128
_SUBLANE = 8
# Keep the table VMEM-resident only when it comfortably fits even on v7x
# (64 MiB VMEM / TensorCore) together with buffering + output tiles + slack.
_RESIDENT_TABLE_MAX_BYTES = 20 * 1024 * 1024


def _round_up(x, m):
    return (x + m - 1) // m * m


def _resident_gather_kernel(idx_ref, table_ref, out_ref):
    """Embedding table resident in VMEM; gather TM rows per grid step.

    Each row is copied table -> out_ref directly (1-sublane load + store),
    avoiding a jnp.concatenate repack and keeping vreg pressure flat."""
    tm = out_ref.shape[0]
    base = pl.program_id(0) * tm
    for k in range(tm):                        # static unroll, tm is small
        row_id = idx_ref[base + k]             # scalar read from SMEM
        out_ref[pl.ds(k, 1), :] = table_ref[pl.ds(row_id, 1), :]


def _hbm_gather_kernel(idx_ref, table_hbm_ref, out_ref, copy_sems):
    """Table stays in HBM; TM row DMAs per step land directly in out block."""
    tm = out_ref.shape[0]
    base = pl.program_id(0) * tm
    copies = []
    for k in range(tm):                        # issue all TM gather DMAs
        row_id = idx_ref[base + k]
        cp = pltpu.make_async_copy(
            table_hbm_ref.at[pl.ds(row_id, 1), :],
            out_ref.at[pl.ds(k, 1), :],
            copy_sems.at[k],
        )
        cp.start()
        copies.append(cp)
    for cp in copies:                          # then drain them all
        cp.wait()


def embedding_lookup(emb_table, idx_flat, *, rows_per_step=32,
                     force_hbm_gather=False):
    """Gather rows of emb_table at idx_flat.

    emb_table: [num_ent, es] float32
    idx_flat:  [M] int32
    returns:   [M, es] float32
    """
    idx_flat = idx_flat.astype(jnp.int32)
    (m,) = idx_flat.shape
    num_ent, es = emb_table.shape
    itemsize = emb_table.dtype.itemsize

    # Lane-dense rows: pad embed dim to a multiple of 128.
    es_p = _round_up(es, _LANE)
    if es_p != es:
        emb_table = jnp.pad(emb_table, ((0, 0), (0, es_p - es)))

    # Sublane-dense output tiles: gather tm (multiple of 8) rows per step.
    tm = _round_up(max(rows_per_step, _SUBLANE), _SUBLANE)
    m_p = _round_up(max(m, 1), tm)
    if m_p != m:
        idx_flat = jnp.pad(idx_flat, (0, m_p - m))    # pad with row 0 (valid)

    grid = (m_p // tm,)
    table_bytes = num_ent * es_p * itemsize
    resident = (not force_hbm_gather) and (table_bytes
                                           <= _RESIDENT_TABLE_MAX_BYTES)

    out_spec = pl.BlockSpec((tm, es_p), lambda i, idx: (i, 0))
    out_shape = jax.ShapeDtypeStruct((m_p, es_p), emb_table.dtype)
    cost = pl.CostEstimate(flops=0, transcendentals=0,
                           bytes_accessed=2 * m_p * es_p * itemsize)

    if resident:
        # Table (possibly double-buffered) + output tiles + slack.
        vmem_limit = int(min(2 * table_bytes + 4 * tm * es_p * itemsize
                             + (8 << 20), 56 << 20))
        out = pl.pallas_call(
            _resident_gather_kernel,
            out_shape=out_shape,
            grid_spec=pltpu.PrefetchScalarGridSpec(
                num_scalar_prefetch=1,                 # idx_flat -> SMEM
                grid=grid,
                in_specs=[pl.BlockSpec((num_ent, es_p),
                                       lambda i, idx: (0, 0))],
                out_specs=out_spec,
            ),
            compiler_params=pltpu.CompilerParams(
                dimension_semantics=("parallel",),
                vmem_limit_bytes=vmem_limit),
            cost_estimate=cost,
        )(idx_flat, emb_table)
    else:
        out = pl.pallas_call(
            _hbm_gather_kernel,
            out_shape=out_shape,
            grid_spec=pltpu.PrefetchScalarGridSpec(
                num_scalar_prefetch=1,                 # idx_flat -> SMEM
                grid=grid,
                in_specs=[pl.BlockSpec(memory_space=pl.ANY)],   # raw HBM ref
                out_specs=out_spec,
                scratch_shapes=[pltpu.SemaphoreType.DMA((tm,))],
            ),
            compiler_params=pltpu.CompilerParams(
                dimension_semantics=("parallel",)),
            cost_estimate=cost,
        )(idx_flat, emb_table)

    return out[:m, :es]


class EmbeddingPallas:
    """JAX/Pallas port of the PyTorch Embedding module."""

    def __init__(self, dataset, parameter, key=None):
        self.ent2id = dataset["ent2id"]
        self.es = parameter["embed_dim"]
        num_ent = len(self.ent2id)
        if parameter["data_form"] == "Pre-Train":
            self.weight = jnp.asarray(dataset["ent2emb"], dtype=jnp.float32)
        else:   # 'In-Train' / 'Discard' -> xavier_uniform_
            if key is None:
                key = jax.random.PRNGKey(0)
            limit = float(np.sqrt(6.0 / (num_ent + self.es)))
            self.weight = jax.random.uniform(
                key, (num_ent, self.es), dtype=jnp.float32,
                minval=-limit, maxval=limit)

    def forward(self, triples, dedup=True):
        # Python glue: string -> id mapping (exactly like the torch module).
        idx = np.asarray(
            [[[self.ent2id[t[0]], self.ent2id[t[2]]] for t in batch]
             for batch in triples], dtype=np.int32)
        b, n, two = idx.shape
        flat = idx.reshape(-1)
        if dedup:
            # KG head/tail entities repeat heavily: gather unique rows only.
            uniq, inverse = np.unique(flat, return_inverse=True)
            rows = embedding_lookup(self.weight, jnp.asarray(uniq, jnp.int32))
            out = jnp.take(rows, jnp.asarray(inverse, jnp.int32), axis=0)
        else:
            out = embedding_lookup(self.weight, jnp.asarray(flat, jnp.int32))
        return out.reshape(b, n, two, self.es)


if __name__ == "__main__":
    # Small deterministic setup.
    key = jax.random.PRNGKey(0)

    num_ent = 10
    embed_dim = 128
    ent_names = [f"e{i}" for i in range(num_ent)]
    ent2id = {name: i for i, name in enumerate(ent_names)}

    dataset = {"ent2id": ent2id}
    parameter = {"device": None, "embed_dim": embed_dim,
                 "data_form": "In-Train"}

    module = EmbeddingPallas(dataset, parameter, key)

    # triples: B=2 batches of N=4 (head, relation, tail) string triples.
    B, N = 2, 4
    triples = [
        [(ent_names[(b * 3 + n) % num_ent], "rel",
          ent_names[(b * 5 + 2 * n + 1) % num_ent]) for n in range(N)]
        for b in range(B)
    ]

    out = jax.block_until_ready(module.forward(triples))

    # Reference check against plain-JAX gather.
    idx_ref = jnp.asarray(
        [[[ent2id[t[0]], ent2id[t[2]]] for t in batch] for batch in triples],
        dtype=jnp.int32)
    ref = jnp.take(module.weight, idx_ref.reshape(-1), axis=0).reshape(
        B, N, 2, embed_dim)

    assert out.shape == (B, N, 2, embed_dim)
    assert out.dtype == jnp.float32
    assert bool(jnp.allclose(out, ref))

    # Non-dedup path uses the kernel on the raw (repeated) index list.
    out2 = jax.block_until_ready(module.forward(triples, dedup=False))
    assert bool(jnp.allclose(out2, ref))

    # Exercise the large-table fallback (manual HBM DMA gather) and the
    # odd-shape padding path (es not a lane multiple, M not a TM multiple).
    k2 = jax.random.PRNGKey(1)
    tbl = jax.random.normal(k2, (13, 72), dtype=jnp.float32)
    ids = jnp.asarray([3, 0, 12, 7, 7, 1, 9, 4, 11, 2, 5], dtype=jnp.int32)
    got_hbm = jax.block_until_ready(
        embedding_lookup(tbl, ids, force_hbm_gather=True))
    got_res = jax.block_until_ready(embedding_lookup(tbl, ids))
    want = jnp.take(tbl, ids, axis=0)
    assert bool(jnp.allclose(got_hbm, want))
    assert bool(jnp.allclose(got_res, want))

    print("KERNEL_OK")
</pallas_src>

<mosaic_0001>
module attributes {stable_mosaic.version = 11 : i64} {
  func.func @_resident_gather_kernel(%arg0: i32, %arg1: memref<32xi32, #tpu.memory_space<smem>>, %arg2: memref<10x128xf32, #tpu.memory_space<vmem>>, %arg3: memref<32x128xf32, #tpu.memory_space<vmem>>) attributes {dimension_semantics = [#tpu.dimension_semantics<parallel>], iteration_bounds = array<i64: 1>, scalar_prefetch = 1 : i64, scratch_operands = 0 : i64, tpu.core_type = #tpu.core_type<tc>, window_params = [{pipeline_mode = #tpu.pipeline_mode<synchronous>, transform_indices = @transform_0, window_bounds = array<i64: 10, 128>}, {transform_indices = @transform_1, window_bounds = array<i64: 32, 128>}]} {
    %c32_i32 = arith.constant 32 : i32
    %0 = arith.muli %arg0, %c32_i32 : i32
    %c0_i32 = arith.constant 0 : i32
    %1 = arith.addi %0, %c0_i32 : i32
    %2 = arith.index_cast %1 : i32 to index
    %3 = memref.load %arg1[%2] : memref<32xi32, #tpu.memory_space<smem>>
    %4 = arith.index_cast %3 : i32 to index
    %c0 = arith.constant 0 : index
    %5 = vector.load %arg2[%4, %c0] : memref<10x128xf32, #tpu.memory_space<vmem>>, vector<1x128xf32>
    %c0_0 = arith.constant 0 : index
    %c0_1 = arith.constant 0 : index
    %6 = vector.load %arg3[%c0_0, %c0_1] : memref<32x128xf32, #tpu.memory_space<vmem>>, vector<1x128xf32>
    tpu.vector_store %arg3[%c0_0, %c0_1], %5 {strides = array<i32>} : memref<32x128xf32, #tpu.memory_space<vmem>>, vector<1x128xf32>,
    %c1_i32 = arith.constant 1 : i32
    %7 = arith.addi %0, %c1_i32 : i32
    %8 = arith.index_cast %7 : i32 to index
    %9 = memref.load %arg1[%8] : memref<32xi32, #tpu.memory_space<smem>>
    %10 = arith.index_cast %9 : i32 to index
    %c0_2 = arith.constant 0 : index
    %11 = vector.load %arg2[%10, %c0_2] : memref<10x128xf32, #tpu.memory_space<vmem>>, vector<1x128xf32>
    %c1 = arith.constant 1 : index
    %c0_3 = arith.constant 0 : index
    %12 = vector.load %arg3[%c1, %c0_3] : memref<32x128xf32, #tpu.memory_space<vmem>>, vector<1x128xf32>
    tpu.vector_store %arg3[%c1, %c0_3], %11 {strides = array<i32>} : memref<32x128xf32, #tpu.memory_space<vmem>>, vector<1x128xf32>,
    %c2_i32 = arith.constant 2 : i32
    %13 = arith.addi %0, %c2_i32 : i32
    %14 = arith.index_cast %13 : i32 to index
    %15 = memref.load %arg1[%14] : memref<32xi32, #tpu.memory_space<smem>>
    %16 = arith.index_cast %15 : i32 to index
    %c0_4 = arith.constant 0 : index
    %17 = vector.load %arg2[%16, %c0_4] : memref<10x128xf32, #tpu.memory_space<vmem>>, vector<1x128xf32>
    %c2 = arith.constant 2 : index
    %c0_5 = arith.constant 0 : index
    %18 = vector.load %arg3[%c2, %c0_5] : memref<32x128xf32, #tpu.memory_space<vmem>>, vector<1x128xf32>
    tpu.vector_store %arg3[%c2, %c0_5], %17 {strides = array<i32>} : memref<32x128xf32, #tpu.memory_space<vmem>>, vector<1x128xf32>,
    %c3_i32 = arith.constant 3 : i32
    %19 = arith.addi %0, %c3_i32 : i32
    %20 = arith.index_cast %19 : i32 to index
    %21 = memref.load %arg1[%20] : memref<32xi32, #tpu.memory_space<smem>>
    %22 = arith.index_cast %21 : i32 to index
    %c0_6 = arith.constant 0 : index
    %23 = vector.load %arg2[%22, %c0_6] : memref<10x128xf32, #tpu.memory_space<vmem>>, vector<1x128xf32>
    %c3 = arith.constant 3 : index
    %c0_7 = arith.constant 0 : index
    %24 = vector.load %arg3[%c3, %c0_7] : memref<32x128xf32, #tpu.memory_space<vmem>>, vector<1x128xf32>
    tpu.vector_store %arg3[%c3, %c0_7], %23 {strides = array<i32>} : memref<32x128xf32, #tpu.memory_space<vmem>>, vector<1x128xf32>,
    %c4_i32 = arith.constant 4 : i32
    %25 = arith.addi %0, %c4_i32 : i32
    %26 = arith.index_cast %25 : i32 to index
    %27 = memref.load %arg1[%26] : memref<32xi32, #tpu.memory_space<smem>>
    %28 = arith.index_cast %27 : i32 to index
    %c0_8 = arith.constant 0 : index
    %29 = vector.load %arg2[%28, %c0_8] : memref<10x128xf32, #tpu.memory_space<vmem>>, vector<1x128xf32>
    %c4 = arith.constant 4 : index
    %c0_9 = arith.constant 0 : index
    %30 = vector.load %arg3[%c4, %c0_9] : memref<32x128xf32, #tpu.memory_space<vmem>>, vector<1x128xf32>
    tpu.vector_store %arg3[%c4, %c0_9], %29 {strides = array<i32>} : memref<32x128xf32, #tpu.memory_space<vmem>>, vector<1x128xf32>,
    %c5_i32 = arith.constant 5 : i32
    %31 = arith.addi %0, %c5_i32 : i32
    %32 = arith.index_cast %31 : i32 to index
    %33 = memref.load %arg1[%32] : memref<32xi32, #tpu.memory_space<smem>>
    %34 = arith.index_cast %33 : i32 to index
    %c0_10 = arith.constant 0 : index
    %35 = vector.load %arg2[%34, %c0_10] : memref<10x128xf32, #tpu.memory_space<vmem>>, vector<1x128xf32>
    %c5 = arith.constant 5 : index
    %c0_11 = arith.constant 0 : index
    %36 = vector.load %arg3[%c5, %c0_11] : memref<32x128xf32, #tpu.memory_space<vmem>>, vector<1x128xf32>
    tpu.vector_store %arg3[%c5, %c0_11], %35 {strides = array<i32>} : memref<32x128xf32, #tpu.memory_space<vmem>>, vector<1x128xf32>,
    %c6_i32 = arith.constant 6 : i32
    %37 = arith.addi %0, %c6_i32 : i32
    %38 = arith.index_cast %37 : i32 to index
    %39 = memref.load %arg1[%38] : memref<32xi32, #tpu.memory_space<smem>>
    %40 = arith.index_cast %39 : i32 to index
    %c0_12 = arith.constant 0 : index
    %41 = vector.load %arg2[%40, %c0_12] : memref<10x128xf32, #tpu.memory_space<vmem>>, vector<1x128xf32>
    %c6 = arith.constant 6 : index
    %c0_13 = arith.constant 0 : index
    %42 = vector.load %arg3[%c6, %c0_13] : memref<32x128xf32, #tpu.memory_space<vmem>>, vector<1x128xf32>
    tpu.vector_store %arg3[%c6, %c0_13], %41 {strides = array<i32>} : memref<32x128xf32, #tpu.memory_space<vmem>>, vector<1x128xf32>,
    %c7_i32 = arith.constant 7 : i32
    %43 = arith.addi %0, %c7_i32 : i32
    %44 = arith.index_cast %43 : i32 to index
    %45 = memref.load %arg1[%44] : memref<32xi32, #tpu.memory_space<smem>>
    %46 = arith.index_cast %45 : i32 to index
    %c0_14 = arith.constant 0 : index
    %47 = vector.load %arg2[%46, %c0_14] : memref<10x128xf32, #tpu.memory_space<vmem>>, vector<1x128xf32>
    %c7 = arith.constant 7 : index
    %c0_15 = arith.constant 0 : index
    %48 = vector.load %arg3[%c7, %c0_15] : memref<32x128xf32, #tpu.memory_space<vmem>>, vector<1x128xf32>
    tpu.vector_store %arg3[%c7, %c0_15], %47 {strides = array<i32>} : memref<32x128xf32, #tpu.memory_space<vmem>>, vector<1x128xf32>,
    %c8_i32 = arith.constant 8 : i32
    %49 = arith.addi %0, %c8_i32 : i32
    %50 = arith.index_cast %49 : i32 to index
    %51 = memref.load %arg1[%50] : memref<32xi32, #tpu.memory_space<smem>>
    %52 = arith.index_cast %51 : i32 to index
    %c0_16 = arith.constant 0 : index
    %53 = vector.load %arg2[%52, %c0_16] : memref<10x128xf32, #tpu.memory_space<vmem>>, vector<1x128xf32>
    %c8 = arith.constant 8 : index
    %c0_17 = arith.constant 0 : index
    %54 = vector.load %arg3[%c8, %c0_17] : memref<32x128xf32, #tpu.memory_space<vmem>>, vector<1x128xf32>
    tpu.vector_store %arg3[%c8, %c0_17], %53 {strides = array<i32>} : memref<32x128xf32, #tpu.memory_space<vmem>>, vector<1x128xf32>,
    %c9_i32 = arith.constant 9 : i32
    %55 = arith.addi %0, %c9_i32 : i32
    %56 = arith.index_cast %55 : i32 to index
    %57 = memref.load %arg1[%56] : memref<32xi32, #tpu.memory_space<smem>>
    %58 = arith.index_cast %57 : i32 to index
    %c0_18 = arith.constant 0 : index
    %59 = vector.load %arg2[%58, %c0_18] : memref<10x128xf32, #tpu.memory_space<vmem>>, vector<1x128xf32>
    %c9 = arith.constant 9 : index
    %c0_19 = arith.constant 0 : index
    %60 = vector.load %arg3[%c9, %c0_19] : memref<32x128xf32, #tpu.memory_space<vmem>>, vector<1x128xf32>
    tpu.vector_store %arg3[%c9, %c0_19], %59 {strides = array<i32>} : memref<32x128xf32, #tpu.memory_space<vmem>>, vector<1x128xf32>,
    %c10_i32 = arith.constant 10 : i32
    %61 = arith.addi %0, %c10_i32 : i32
    %62 = arith.index_cast %61 : i32 to index
    %63 = memref.load %arg1[%62] : memref<32xi32, #tpu.memory_space<smem>>
    %64 = arith.index_cast %63 : i32 to index
    %c0_20 = arith.constant 0 : index
    %65 = vector.load %arg2[%64, %c0_20] : memref<10x128xf32, #tpu.memory_space<vmem>>, vector<1x128xf32>
    %c10 = arith.constant 10 : index
    %c0_21 = arith.constant 0 : index
    %66 = vector.load %arg3[%c10, %c0_21] : memref<32x128xf32, #tpu.memory_space<vmem>>, vector<1x128xf32>
    tpu.vector_store %arg3[%c10, %c0_21], %65 {strides = array<i32>} : memref<32x128xf32, #tpu.memory_space<vmem>>, vector<1x128xf32>,
    %c11_i32 = arith.constant 11 : i32
    %67 = arith.addi %0, %c11_i32 : i32
    %68 = arith.index_cast %67 : i32 to index
    %69 = memref.load %arg1[%68] : memref<32xi32, #tpu.memory_space<smem>>
    %70 = arith.index_cast %69 : i32 to index
    %c0_22 = arith.constant 0 : index
    %71 = vector.load %arg2[%70, %c0_22] : memref<10x128xf32, #tpu.memory_space<vmem>>, vector<1x128xf32>
    %c11 = arith.constant 11 : index
    %c0_23 = arith.constant 0 : index
    %72 = vector.load %arg3[%c11, %c0_23] : memref<32x128xf32, #tpu.memory_space<vmem>>, vector<1x128xf32>
    tpu.vector_store %arg3[%c11, %c0_23], %71 {strides = array<i32>} : memref<32x128xf32, #tpu.memory_space<vmem>>, vector<1x128xf32>,
    %c12_i32 = arith.constant 12 : i32
    %73 = arith.addi %0, %c12_i32 : i32
    %74 = arith.index_cast %73 : i32 to index
    %75 = memref.load %arg1[%74] : memref<32xi32, #tpu.memory_space<smem>>
    %76 = arith.index_cast %75 : i32 to index
    %c0_24 = arith.constant 0 : index
    %77 = vector.load %arg2[%76, %c0_24] : memref<10x128xf32, #tpu.memory_space<vmem>>, vector<1x128xf32>
    %c12 = arith.constant 12 : index
    %c0_25 = arith.constant 0 : index
    %78 = vector.load %arg3[%c12, %c0_25] : memref<32x128xf32, #tpu.memory_space<vmem>>, vector<1x128xf32>
    tpu.vector_store %arg3[%c12, %c0_25], %77 {strides = array<i32>} : memref<32x128xf32, #tpu.memory_space<vmem>>, vector<1x128xf32>,
    %c13_i32 = arith.constant 13 : i32
    %79 = arith.addi %0, %c13_i32 : i32
    %80 = arith.index_cast %79 : i32 to index
    %81 = memref.load %arg1[%80] : memref<32xi32, #tpu.memory_space<smem>>
    %82 = arith.index_cast %81 : i32 to index
    %c0_26 = arith.constant 0 : index
    %83 = vector.load %arg2[%82, %c0_26] : memref<10x128xf32, #tpu.memory_space<vmem>>, vector<1x128xf32>
    %c13 = arith.constant 13 : index
    %c0_27 = arith.constant 0 : index
    %84 = vector.load %arg3[%c13, %c0_27] : memref<32x128xf32, #tpu.memory_space<vmem>>, vector<1x128xf32>
    tpu.vector_store %arg3[%c13, %c0_27], %83 {strides = array<i32>} : memref<32x128xf32, #tpu.memory_space<vmem>>, vector<1x128xf32>,
    %c14_i32 = arith.constant 14 : i32
    %85 = arith.addi %0, %c14_i32 : i32
    %86 = arith.index_cast %85 : i32 to index
    %87 = memref.load %arg1[%86] : memref<32xi32, #tpu.memory_space<smem>>
    %88 = arith.index_cast %87 : i32 to index
    %c0_28 = arith.constant 0 : index
    %89 = vector.load %arg2[%88, %c0_28] : memref<10x128xf32, #tpu.memory_space<vmem>>, vector<1x128xf32>
    %c14 = arith.constant 14 : index
    %c0_29 = arith.constant 0 : index
    %90 = vector.load %arg3[%c14, %c0_29] : memref<32x128xf32, #tpu.memory_space<vmem>>, vector<1x128xf32>
    tpu.vector_store %arg3[%c14, %c0_29], %89 {strides = array<i32>} : memref<32x128xf32, #tpu.memory_space<vmem>>, vector<1x128xf32>,
    %c15_i32 = arith.constant 15 : i32
    %91 = arith.addi %0, %c15_i32 : i32
    %92 = arith.index_cast %91 : i32 to index
    %93 = memref.load %arg1[%92] : memref<32xi32, #tpu.memory_space<smem>>
    %94 = arith.index_cast %93 : i32 to index
    %c0_30 = arith.constant 0 : index
    %95 = vector.load %arg2[%94, %c0_30] : memref<10x128xf32, #tpu.memory_space<vmem>>, vector<1x128xf32>
    %c15 = arith.constant 15 : index
    %c0_31 = arith.constant 0 : index
    %96 = vector.load %arg3[%c15, %c0_31] : memref<32x128xf32, #tpu.memory_space<vmem>>, vector<1x128xf32>
    tpu.vector_store %arg3[%c15, %c0_31], %95 {strides = array<i32>} : memref<32x128xf32, #tpu.memory_space<vmem>>, vector<1x128xf32>,
    %c16_i32 = arith.constant 16 : i32
    %97 = arith.addi %0, %c16_i32 : i32
    %98 = arith.index_cast %97 : i32 to index
    %99 = memref.load %arg1[%98] : memref<32xi32, #tpu.memory_space<smem>>
    %100 = arith.index_cast %99 : i32 to index
    %c0_32 = arith.constant 0 : index
    %101 = vector.load %arg2[%100, %c0_32] : memref<10x128xf32, #tpu.memory_space<vmem>>, vector<1x128xf32>
    %c16 = arith.constant 16 : index
    %c0_33 = arith.constant 0 : index
    %102 = vector.load %arg3[%c16, %c0_33] : memref<32x128xf32, #tpu.memory_space<vmem>>, vector<1x128xf32>
    tpu.vector_store %arg3[%c16, %c0_33], %101 {strides = array<i32>} : memref<32x128xf32, #tpu.memory_space<vmem>>, vector<1x128xf32>,
    %c17_i32 = arith.constant 17 : i32
    %103 = arith.addi %0, %c17_i32 : i32
    %104 = arith.index_cast %103 : i32 to index
    %105 = memref.load %arg1[%104] : memref<32xi32, #tpu.memory_space<smem>>
    %106 = arith.index_cast %105 : i32 to index
    %c0_34 = arith.constant 0 : index
    %107 = vector.load %arg2[%106, %c0_34] : memref<10x128xf32, #tpu.memory_space<vmem>>, vector<1x128xf32>
    %c17 = arith.constant 17 : index
    %c0_35 = arith.constant 0 : index
    %108 = vector.load %arg3[%c17, %c0_35] : memref<32x128xf32, #tpu.memory_space<vmem>>, vector<1x128xf32>
    tpu.vector_store %arg3[%c17, %c0_35], %107 {strides = array<i32>} : memref<32x128xf32, #tpu.memory_space<vmem>>, vector<1x128xf32>,
    %c18_i32 = arith.constant 18 : i32
    %109 = arith.addi %0, %c18_i32 : i32
    %110 = arith.index_cast %109 : i32 to index
    %111 = memref.load %arg1[%110] : memref<32xi32, #tpu.memory_space<smem>>
    %112 = arith.index_cast %111 : i32 to index
    %c0_36 = arith.constant 0 : index
    %113 = vector.load %arg2[%112, %c0_36] : memref<10x128xf32, #tpu.memory_space<vmem>>, vector<1x128xf32>
    %c18 = arith.constant 18 : index
    %c0_37 = arith.constant 0 : index
    %114 = vector.load %arg3[%c18, %c0_37] : memref<32x128xf32, #tpu.memory_space<vmem>>, vector<1x128xf32>
    tpu.vector_store %arg3[%c18, %c0_37], %113 {strides = array<i32>} : memref<32x128xf32, #tpu.memory_space<vmem>>, vector<1x128xf32>,
    %c19_i32 = arith.constant 19 : i32
    %115 = arith.addi %0, %c19_i32 : i32
    %116 = arith.index_cast %115 : i32 to index
    %117 = memref.load %arg1[%116] : memref<32xi32, #tpu.memory_space<smem>>
    %118 = arith.index_cast %117 : i32 to index
    %c0_38 = arith.constant 0 : index
    %119 = vector.load %arg2[%118, %c0_38] : memref<10x128xf32, #tpu.memory_space<vmem>>, vector<1x128xf32>
    %c19 = arith.constant 19 : index
    %c0_39 = arith.constant 0 : index
    %120 = vector.load %arg3[%c19, %c0_39] : memref<32x128xf32, #tpu.memory_space<vmem>>, vector<1x128xf32>
    tpu.vector_store %arg3[%c19, %c0_39], %119 {strides = array<i32>} : memref<32x128xf32, #tpu.memory_space<vmem>>, vector<1x128xf32>,
    %c20_i32 = arith.constant 20 : i32
    %121 = arith.addi %0, %c20_i32 : i32
    %122 = arith.index_cast %121 : i32 to index
    %123 = memref.load %arg1[%122] : memref<32xi32, #tpu.memory_space<smem>>
    %124 = arith.index_cast %123 : i32 to index
    %c0_40 = arith.constant 0 : index
    %125 = vector.load %arg2[%124, %c0_40] : memref<10x128xf32, #tpu.memory_space<vmem>>, vector<1x128xf32>
    %c20 = arith.constant 20 : index
    %c0_41 = arith.constant 0 : index
    %126 = vector.load %arg3[%c20, %c0_41] : memref<32x128xf32, #tpu.memory_space<vmem>>, vector<1x128xf32>
    tpu.vector_store %arg3[%c20, %c0_41], %125 {strides = array<i32>} : memref<32x128xf32, #tpu.memory_space<vmem>>, vector<1x128xf32>,
    %c21_i32 = arith.constant 21 : i32
    %127 = arith.addi %0, %c21_i32 : i32
    %128 = arith.index_cast %127 : i32 to index
    %129 = memref.load %arg1[%128] : memref<32xi32, #tpu.memory_space<smem>>
    %130 = arith.index_cast %129 : i32 to index
    %c0_42 = arith.constant 0 : index
    %131 = vector.load %arg2[%130, %c0_42] : memref<10x128xf32, #tpu.memory_space<vmem>>, vector<1x128xf32>
    %c21 = arith.constant 21 : index
    %c0_43 = arith.constant 0 : index
    %132 = vector.load %arg3[%c21, %c0_43] : memref<32x128xf32, #tpu.memory_space<vmem>>, vector<1x128xf32>
    tpu.vector_store %arg3[%c21, %c0_43], %131 {strides = array<i32>} : memref<32x128xf32, #tpu.memory_space<vmem>>, vector<1x128xf32>,
    %c22_i32 = arith.constant 22 : i32
    %133 = arith.addi %0, %c22_i32 : i32
    %134 = arith.index_cast %133 : i32 to index
    %135 = memref.load %arg1[%134] : memref<32xi32, #tpu.memory_space<smem>>
    %136 = arith.index_cast %135 : i32 to index
    %c0_44 = arith.constant 0 : index
    %137 = vector.load %arg2[%136, %c0_44] : memref<10x128xf32, #tpu.memory_space<vmem>>, vector<1x128xf32>
    %c22 = arith.constant 22 : index
    %c0_45 = arith.constant 0 : index
    %138 = vector.load %arg3[%c22, %c0_45] : memref<32x128xf32, #tpu.memory_space<vmem>>, vector<1x128xf32>
    tpu.vector_store %arg3[%c22, %c0_45], %137 {strides = array<i32>} : memref<32x128xf32, #tpu.memory_space<vmem>>, vector<1x128xf32>,
    %c23_i32 = arith.constant 23 : i32
    %139 = arith.addi %0, %c23_i32 : i32
    %140 = arith.index_cast %139 : i32 to index
    %141 = memref.load %arg1[%140] : memref<32xi32, #tpu.memory_space<smem>>
    %142 = arith.index_cast %141 : i32 to index
    %c0_46 = arith.constant 0 : index
    %143 = vector.load %arg2[%142, %c0_46] : memref<10x128xf32, #tpu.memory_space<vmem>>, vector<1x128xf32>
    %c23 = arith.constant 23 : index
    %c0_47 = arith.constant 0 : index
    %144 = vector.load %arg3[%c23, %c0_47] : memref<32x128xf32, #tpu.memory_space<vmem>>, vector<1x128xf32>
    tpu.vector_store %arg3[%c23, %c0_47], %143 {strides = array<i32>} : memref<32x128xf32, #tpu.memory_space<vmem>>, vector<1x128xf32>,
    %c24_i32 = arith.constant 24 : i32
    %145 = arith.addi %0, %c24_i32 : i32
    %146 = arith.index_cast %145 : i32 to index
    %147 = memref.load %arg1[%146] : memref<32xi32, #tpu.memory_space<smem>>
    %148 = arith.index_cast %147 : i32 to index
    %c0_48 = arith.constant 0 : index
    %149 = vector.load %arg2[%148, %c0_48] : memref<10x128xf32, #tpu.memory_space<vmem>>, vector<1x128xf32>
    %c24 = arith.constant 24 : index
    %c0_49 = arith.constant 0 : index
    %150 = vector.load %arg3[%c24, %c0_49] : memref<32x128xf32, #tpu.memory_space<vmem>>, vector<1x128xf32>
    tpu.vector_store %arg3[%c24, %c0_49], %149 {strides = array<i32>} : memref<32x128xf32, #tpu.memory_space<vmem>>, vector<1x128xf32>,
    %c25_i32 = arith.constant 25 : i32
    %151 = arith.addi %0, %c25_i32 : i32
    %152 = arith.index_cast %151 : i32 to index
    %153 = memref.load %arg1[%152] : memref<32xi32, #tpu.memory_space<smem>>
    %154 = arith.index_cast %153 : i32 to index
    %c0_50 = arith.constant 0 : index
    %155 = vector.load %arg2[%154, %c0_50] : memref<10x128xf32, #tpu.memory_space<vmem>>, vector<1x128xf32>
    %c25 = arith.constant 25 : index
    %c0_51 = arith.constant 0 : index
    %156 = vector.load %arg3[%c25, %c0_51] : memref<32x128xf32, #tpu.memory_space<vmem>>, vector<1x128xf32>
    tpu.vector_store %arg3[%c25, %c0_51], %155 {strides = array<i32>} : memref<32x128xf32, #tpu.memory_space<vmem>>, vector<1x128xf32>,
    %c26_i32 = arith.constant 26 : i32
    %157 = arith.addi %0, %c26_i32 : i32
    %158 = arith.index_cast %157 : i32 to index
    %159 = memref.load %arg1[%158] : memref<32xi32, #tpu.memory_space<smem>>
    %160 = arith.index_cast %159 : i32 to index
    %c0_52 = arith.constant 0 : index
    %161 = vector.load %arg2[%160, %c0_52] : memref<10x128xf32, #tpu.memory_space<vmem>>, vector<1x128xf32>
    %c26 = arith.constant 26 : index
    %c0_53 = arith.constant 0 : index
    %162 = vector.load %arg3[%c26, %c0_53] : memref<32x128xf32, #tpu.memory_space<vmem>>, vector<1x128xf32>
    tpu.vector_store %arg3[%c26, %c0_53], %161 {strides = array<i32>} : memref<32x128xf32, #tpu.memory_space<vmem>>, vector<1x128xf32>,
    %c27_i32 = arith.constant 27 : i32
    %163 = arith.addi %0, %c27_i32 : i32
    %164 = arith.index_cast %163 : i32 to index
    %165 = memref.load %arg1[%164] : memref<32xi32, #tpu.memory_space<smem>>
    %166 = arith.index_cast %165 : i32 to index
    %c0_54 = arith.constant 0 : index
    %167 = vector.load %arg2[%166, %c0_54] : memref<10x128xf32, #tpu.memory_space<vmem>>, vector<1x128xf32>
    %c27 = arith.constant 27 : index
    %c0_55 = arith.constant 0 : index
    %168 = vector.load %arg3[%c27, %c0_55] : memref<32x128xf32, #tpu.memory_space<vmem>>, vector<1x128xf32>
    tpu.vector_store %arg3[%c27, %c0_55], %167 {strides = array<i32>} : memref<32x128xf32, #tpu.memory_space<vmem>>, vector<1x128xf32>,
    %c28_i32 = arith.constant 28 : i32
    %169 = arith.addi %0, %c28_i32 : i32
    %170 = arith.index_cast %169 : i32 to index
    %171 = memref.load %arg1[%170] : memref<32xi32, #tpu.memory_space<smem>>
    %172 = arith.index_cast %171 : i32 to index
    %c0_56 = arith.constant 0 : index
    %173 = vector.load %arg2[%172, %c0_56] : memref<10x128xf32, #tpu.memory_space<vmem>>, vector<1x128xf32>
    %c28 = arith.constant 28 : index
    %c0_57 = arith.constant 0 : index
    %174 = vector.load %arg3[%c28, %c0_57] : memref<32x128xf32, #tpu.memory_space<vmem>>, vector<1x128xf32>
    tpu.vector_store %arg3[%c28, %c0_57], %173 {strides = array<i32>} : memref<32x128xf32, #tpu.memory_space<vmem>>, vector<1x128xf32>,
    %c29_i32 = arith.constant 29 : i32
    %175 = arith.addi %0, %c29_i32 : i32
    %176 = arith.index_cast %175 : i32 to index
    %177 = memref.load %arg1[%176] : memref<32xi32, #tpu.memory_space<smem>>
    %178 = arith.index_cast %177 : i32 to index
    %c0_58 = arith.constant 0 : index
    %179 = vector.load %arg2[%178, %c0_58] : memref<10x128xf32, #tpu.memory_space<vmem>>, vector<1x128xf32>
    %c29 = arith.constant 29 : index
    %c0_59 = arith.constant 0 : index
    %180 = vector.load %arg3[%c29, %c0_59] : memref<32x128xf32, #tpu.memory_space<vmem>>, vector<1x128xf32>
    tpu.vector_store %arg3[%c29, %c0_59], %179 {strides = array<i32>} : memref<32x128xf32, #tpu.memory_space<vmem>>, vector<1x128xf32>,
    %c30_i32 = arith.constant 30 : i32
    %181 = arith.addi %0, %c30_i32 : i32
    %182 = arith.index_cast %181 : i32 to index
    %183 = memref.load %arg1[%182] : memref<32xi32, #tpu.memory_space<smem>>
    %184 = arith.index_cast %183 : i32 to index
    %c0_60 = arith.constant 0 : index
    %185 = vector.load %arg2[%184, %c0_60] : memref<10x128xf32, #tpu.memory_space<vmem>>, vector<1x128xf32>
    %c30 = arith.constant 30 : index
    %c0_61 = arith.constant 0 : index
    %186 = vector.load %arg3[%c30, %c0_61] : memref<32x128xf32, #tpu.memory_space<vmem>>, vector<1x128xf32>
    tpu.vector_store %arg3[%c30, %c0_61], %185 {strides = array<i32>} : memref<32x128xf32, #tpu.memory_space<vmem>>, vector<1x128xf32>,
    %c31_i32 = arith.constant 31 : i32
    %187 = arith.addi %0, %c31_i32 : i32
    %188 = arith.index_cast %187 : i32 to index
    %189 = memref.load %arg1[%188] : memref<32xi32, #tpu.memory_space<smem>>
    %190 = arith.index_cast %189 : i32 to index
    %c0_62 = arith.constant 0 : index
    %191 = vector.load %arg2[%190, %c0_62] : memref<10x128xf32, #tpu.memory_space<vmem>>, vector<1x128xf32>
    %c31 = arith.constant 31 : index
    %c0_63 = arith.constant 0 : index
    %192 = vector.load %arg3[%c31, %c0_63] : memref<32x128xf32, #tpu.memory_space<vmem>>, vector<1x128xf32>
    tpu.vector_store %arg3[%c31, %c0_63], %191 {strides = array<i32>} : memref<32x128xf32, #tpu.memory_space<vmem>>, vector<1x128xf32>,
    return
  }
  func.func @transform_0(%arg0: i32, %arg1: memref<32xi32, #tpu.memory_space<smem>>) -> (i32, i32) {
    %c0_i32 = arith.constant 0 : i32
    %c0_i32_0 = arith.constant 0 : i32
    %c0_i32_1 = arith.constant 0 : i32
    return %c0_i32, %c0_i32_0 : i32, i32
  }
  func.func @transform_1(%arg0: i32, %arg1: memref<32xi32, #tpu.memory_space<smem>>) -> (i32, i32) {
    %c0_i32 = arith.constant 0 : i32
    %c0_i32_0 = arith.constant 0 : i32
    return %arg0, %c0_i32 : i32, i32
  }
}

</mosaic_0001>

<llo_original>
// kernel: tpu_custom_call.1
$region0: #{tpu_custom_call.1}
  #allocation0 [shape = 'u32[]', space=smem, size = 0x4, offset = 0x4, fixed_abs, tag = 'smem constant byte address 0x4 - core index']
  #allocation1 [shape = 'u32[72,128]{1,0:T(1,128)}', space=vmem, size = 0x9000, scoped, tag = 'internal scratch']
  #allocation2 [shape = 's32[1]{0}', space=sflag, size = 0x4, scoped, tag = 'scoped memory for tpu_custom_call.1']
  #allocation3 [shape = 'u8[512]{0}', space=smem, size = 0x200, scoped, tag = 'prefetched SMEM operand 0']
  %s0 = inlined_call_operand.hbm [shape: s32[32], index: 0, kind: input, shape index: {}]
  %s1 = inlined_call_operand.hbm [shape: f32[10,128], index: 1, kind: input, shape index: {}]
  %s2 = inlined_call_operand.hbm [shape: f32[32,128], index: 2, kind: output, shape index: {}]
  %s3 = sld [smem:[#allocation0]]
  $region18: #{tpu_custom_call.1} parent=0
    _
  %s5 = ssub.s32 1, %s3
  %s6 = scalar_select 0, %s5, %s3
  %s8 = sshll.u32 %s0, 4
  %s9 = int_to_ptr.hbm [resolvable:$true] %s8
  %11 = dma.hbm_to_smem %s9, 16, [#allocation3], [#allocation2]
  %13 = dma.done [#allocation2], 16
  %14 = sfence
  $region1: #{tpu_custom_call.1} parent=0
    #allocation4 [shape = 'u8[8192]{0}', space=vmem, size = 0x2000, scoped, tag = 'input window, operand 1, single buffered']
    #allocation5 [shape = 's32[1]{0}', space=sflag, size = 0x4, scoped, tag = 'scoped memory for tpu_custom_call.1']
    #allocation6 [shape = 's32[1]{0}', space=sflag, size = 0x4, scoped, tag = 'scoped memory for tpu_custom_call.1']
    #allocation7 [shape = 'u8[16384]{0}', space=vmem, size = 0x4000, scoped, tag = 'output window, operand 0, single buffered']
    %15 = vsyncpa [#allocation5], 0
    %16 = vsyncpa [#allocation6], 0
    // Predicated region
    $region2: #{tpu_custom_call.1} parent=1 // pred_check
      _
    $region3: #{tpu_custom_call.1} parent=1 // pred_check_branch
      %18 = sbr.rel (0) target = $region5
    $region4: #{tpu_custom_call.1} parent=1 // pred_region
      %20 = vsyncadd [#allocation5], 0
      %s21 = sshll.u32 %s1, 4
      %s22 = int_to_ptr.hbm [resolvable:$true] %s21
      %s23 = sshll.u32 [#allocation4], 4
      %s24 = int_to_ptr.vmem [resolvable:$true] %s23
      %29 = dma.hbm_to_vmem [thread:$0]  %s22, 256, %s24, [#allocation5], 128, 128, 8
    $region5: #{tpu_custom_call.1} parent=1 // pred_fallthru
      _
    // Predicated region
    $region6: #{tpu_custom_call.1} parent=1 // pred_check
      _
    $region7: #{tpu_custom_call.1} parent=1 // pred_check_branch
      %31 = sbr.rel (0) target = $region9
    $region8: #{tpu_custom_call.1} parent=1 // pred_region
      %33 = dma.done [#allocation5], 256
    $region9: #{tpu_custom_call.1} parent=1 // pred_fallthru
      _
    %s34 = smul.u32 0, 32
    %s35 = sld [smem:[#allocation3 + %s34]]
    %s36 = scalar_lea.vmem [#allocation4], %s35
    %v37 = vld [vmem:[%s36] sm:$0x1]
    %38 = vst [vmem:[#allocation7] sm:$0x1] %v37
    %s39 = sadd.s32 %s34, 1
    %s40 = sld [smem:[#allocation3 + %s39]]
    %s41 = scalar_lea.vmem [#allocation4], %s40
    %v42 = vld [vmem:[%s41] sm:$0x1]
    %43 = vst [vmem:[#allocation7 + $0x1] sm:$0x1] %v42
    %s44 = sadd.s32 %s34, 2
    %s45 = sld [smem:[#allocation3 + %s44]]
    %s46 = scalar_lea.vmem [#allocation4], %s45
    %v47 = vld [vmem:[%s46] sm:$0x1]
    %48 = vst [vmem:[#allocation7 + $0x2] sm:$0x1] %v47
    %s49 = sadd.s32 %s34, 3
    %s50 = sld [smem:[#allocation3 + %s49]]
    %s51 = scalar_lea.vmem [#allocation4], %s50
    %v52 = vld [vmem:[%s51] sm:$0x1]
    %53 = vst [vmem:[#allocation7 + $0x3] sm:$0x1] %v52
    %s54 = sadd.s32 %s34, 4
    %s55 = sld [smem:[#allocation3 + %s54]]
    %s56 = scalar_lea.vmem [#allocation4], %s55
    %v57 = vld [vmem:[%s56] sm:$0x1]
    %58 = vst [vmem:[#allocation7 + $0x4] sm:$0x1] %v57
    %s59 = sadd.s32 %s34, 5
    %s60 = sld [smem:[#allocation3 + %s59]]
    %s61 = scalar_lea.vmem [#allocation4], %s60
    %v62 = vld [vmem:[%s61] sm:$0x1]
    %63 = vst [vmem:[#allocation7 + $0x5] sm:$0x1] %v62
    %s64 = sadd.s32 %s34, 6
    %s65 = sld [smem:[#allocation3 + %s64]]
    %s66 = scalar_lea.vmem [#allocation4], %s65
    %v67 = vld [vmem:[%s66] sm:$0x1]
    %68 = vst [vmem:[#allocation7 + $0x6] sm:$0x1] %v67
    %s69 = sadd.s32 %s34, 7
    %s70 = sld [smem:[#allocation3 + %s69]]
    %s71 = scalar_lea.vmem [#allocation4], %s70
    %v72 = vld [vmem:[%s71] sm:$0x1]
    %73 = vst [vmem:[#allocation7 + $0x7] sm:$0x1] %v72
    %s74 = sadd.s32 %s34, 8
    %s75 = sld [smem:[#allocation3 + %s74]]
    %s76 = scalar_lea.vmem [#allocation4], %s75
    %v77 = vld [vmem:[%s76] sm:$0x1]
    %78 = vst [vmem:[#allocation7 + $0x8] sm:$0x1] %v77
    %s79 = sadd.s32 %s34, 9
    %s80 = sld [smem:[#allocation3 + %s79]]
    %s81 = scalar_lea.vmem [#allocation4], %s80
    %v82 = vld [vmem:[%s81] sm:$0x1]
    %83 = vst [vmem:[#allocation7 + $0x9] sm:$0x1] %v82
    %s84 = sadd.s32 %s34, 10
    %s85 = sld [smem:[#allocation3 + %s84]]
    %s86 = scalar_lea.vmem [#allocation4], %s85
    %v87 = vld [vmem:[%s86] sm:$0x1]
    %88 = vst [vmem:[#allocation7 + $0xa] sm:$0x1] %v87
    %s89 = sadd.s32 %s34, 11
    %s90 = sld [smem:[#allocation3 + %s89]]
    %s91 = scalar_lea.vmem [#allocation4], %s90
    %v92 = vld [vmem:[%s91] sm:$0x1]
    %93 = vst [vmem:[#allocation7 + $0xb] sm:$0x1] %v92
    %s94 = sadd.s32 %s34, 12
    %s95 = sld [smem:[#allocation3 + %s94]]
    %s96 = scalar_lea.vmem [#allocation4], %s95
    %v97 = vld [vmem:[%s96] sm:$0x1]
    %98 = vst [vmem:[#allocation7 + $0xc] sm:$0x1] %v97
    %s99 = sadd.s32 %s34, 13
    %s100 = sld [smem:[#allocation3 + %s99]]
    %s101 = scalar_lea.vmem [#allocation4], %s100
    %v102 = vld [vmem:[%s101] sm:$0x1]
    %103 = vst [vmem:[#allocation7 + $0xd] sm:$0x1] %v102
    %s104 = sadd.s32 %s34, 14
    %s105 = sld [smem:[#allocation3 + %s104]]
    %s106 = scalar_lea.vmem [#allocation4], %s105
    %v107 = vld [vmem:[%s106] sm:$0x1]
    %108 = vst [vmem:[#allocation7 + $0xe] sm:$0x1] %v107
    %s109 = sadd.s32 %s34, 15
    %s110 = sld [smem:[#allocation3 + %s109]]
    %s111 = scalar_lea.vmem [#allocation4], %s110
    %v112 = vld [vmem:[%s111] sm:$0x1]
    %113 = vst [vmem:[#allocation7 + $0xf] sm:$0x1] %v112
    %s114 = sadd.s32 %s34, 16
    %s115 = sld [smem:[#allocation3 + %s114]]
    %s116 = scalar_lea.vmem [#allocation4], %s115
    %v117 = vld [vmem:[%s116] sm:$0x1]
    %118 = vst [vmem:[#allocation7 + $0x10] sm:$0x1] %v117
    %s119 = sadd.s32 %s34, 17
    %s120 = sld [smem:[#allocation3 + %s119]]
    %s121 = scalar_lea.vmem [#allocation4], %s120
    %v122 = vld [vmem:[%s121] sm:$0x1]
    %123 = vst [vmem:[#allocation7 + $0x11] sm:$0x1] %v122
    %s124 = sadd.s32 %s34, 18
    %s125 = sld [smem:[#allocation3 + %s124]]
    %s126 = scalar_lea.vmem [#allocation4], %s125
    %v127 = vld [vmem:[%s126] sm:$0x1]
    %128 = vst [vmem:[#allocation7 + $0x12] sm:$0x1] %v127
    %s129 = sadd.s32 %s34, 19
    %s130 = sld [smem:[#allocation3 + %s129]]
    %s131 = scalar_lea.vmem [#allocation4], %s130
    %v132 = vld [vmem:[%s131] sm:$0x1]
    %133 = vst [vmem:[#allocation7 + $0x13] sm:$0x1] %v132
    %s134 = sadd.s32 %s34, 20
    %s135 = sld [smem:[#allocation3 + %s134]]
    %s136 = scalar_lea.vmem [#allocation4], %s135
    %v137 = vld [vmem:[%s136] sm:$0x1]
    %138 = vst [vmem:[#allocation7 + $0x14] sm:$0x1] %v137
    %s139 = sadd.s32 %s34, 21
    %s140 = sld [smem:[#allocation3 + %s139]]
    %s141 = scalar_lea.vmem [#allocation4], %s140
    %v142 = vld [vmem:[%s141] sm:$0x1]
    %143 = vst [vmem:[#allocation7 + $0x15] sm:$0x1] %v142
    %s144 = sadd.s32 %s34, 22
    %s145 = sld [smem:[#allocation3 + %s144]]
    %s146 = scalar_lea.vmem [#allocation4], %s145
    %v147 = vld [vmem:[%s146] sm:$0x1]
    %148 = vst [vmem:[#allocation7 + $0x16] sm:$0x1] %v147
    %s149 = sadd.s32 %s34, 23
    %s150 = sld [smem:[#allocation3 + %s149]]
    %s151 = scalar_lea.vmem [#allocation4], %s150
    %v152 = vld [vmem:[%s151] sm:$0x1]
    %153 = vst [vmem:[#allocation7 + $0x17] sm:$0x1] %v152
    %s154 = sadd.s32 %s34, 24
    %s155 = sld [smem:[#allocation3 + %s154]]
    %s156 = scalar_lea.vmem [#allocation4], %s155
    %v157 = vld [vmem:[%s156] sm:$0x1]
    %158 = vst [vmem:[#allocation7 + $0x18] sm:$0x1] %v157
    %s159 = sadd.s32 %s34, 25
    %s160 = sld [smem:[#allocation3 + %s159]]
    %s161 = scalar_lea.vmem [#allocation4], %s160
    %v162 = vld [vmem:[%s161] sm:$0x1]
    %163 = vst [vmem:[#allocation7 + $0x19] sm:$0x1] %v162
    %s164 = sadd.s32 %s34, 26
    %s165 = sld [smem:[#allocation3 + %s164]]
    %s166 = scalar_lea.vmem [#allocation4], %s165
    %v167 = vld [vmem:[%s166] sm:$0x1]
    %168 = vst [vmem:[#allocation7 + $0x1a] sm:$0x1] %v167
    %s169 = sadd.s32 %s34, 27
    %s170 = sld [smem:[#allocation3 + %s169]]
    %s171 = scalar_lea.vmem [#allocation4], %s170
    %v172 = vld [vmem:[%s171] sm:$0x1]
    %173 = vst [vmem:[#allocation7 + $0x1b] sm:$0x1] %v172
    %s174 = sadd.s32 %s34, 28
    %s175 = sld [smem:[#allocation3 + %s174]]
    %s176 = scalar_lea.vmem [#allocation4], %s175
    %v177 = vld [vmem:[%s176] sm:$0x1]
    %178 = vst [vmem:[#allocation7 + $0x1c] sm:$0x1] %v177
    %s179 = sadd.s32 %s34, 29
    %s180 = sld [smem:[#allocation3 + %s179]]
    %s181 = scalar_lea.vmem [#allocation4], %s180
    %v182 = vld [vmem:[%s181] sm:$0x1]
    %183 = vst [vmem:[#allocation7 + $0x1d] sm:$0x1] %v182
    %s184 = sadd.s32 %s34, 30
    %s185 = sld [smem:[#allocation3 + %s184]]
    %s186 = scalar_lea.vmem [#allocation4], %s185
    %v187 = vld [vmem:[%s186] sm:$0x1]
    %188 = vst [vmem:[#allocation7 + $0x1e] sm:$0x1] %v187
    %s189 = sadd.s32 %s34, 31
    %s190 = sld [smem:[#allocation3 + %s189]]
    %s191 = scalar_lea.vmem [#allocation4], %s190
    %v192 = vld [vmem:[%s191] sm:$0x1]
    %193 = vst [vmem:[#allocation7 + $0x1f] sm:$0x1] %v192
    // Predicated region
    $region10: #{tpu_custom_call.1} parent=1 // pred_check
      _
    $region11: #{tpu_custom_call.1} parent=1 // pred_check_branch
      %195 = sbr.rel (0) target = $region13
    $region12: #{tpu_custom_call.1} parent=1 // pred_region
      %197 = vsyncadd [#allocation6], 0
      %s198 = sshll.u32 [#allocation7], 4
      %s199 = int_to_ptr.vmem [resolvable:$true] %s198
      %s200 = sshll.u32 %s2, 4
      %s201 = int_to_ptr.hbm [resolvable:$true] %s200
      %206 = dma.vmem_to_hbm [thread:$0]  %s199, 512, %s201, [#allocation6], 128, 128, 8
    $region13: #{tpu_custom_call.1} parent=1 // pred_fallthru
      _
    // Predicated region
    $region14: #{tpu_custom_call.1} parent=1 // pred_check
      _
    $region15: #{tpu_custom_call.1} parent=1 // pred_check_branch
      %208 = sbr.rel (0) target = $region17
    $region16: #{tpu_custom_call.1} parent=1 // pred_region
      %210 = dma.done [#allocation6], 512
    $region17: #{tpu_custom_call.1} parent=1 // pred_fallthru
      _
    %211 = vsyncpa [#allocation5], 1
    %212 = vsyncpa [#allocation6], 1

</llo_original>
